<compile_context>
chip_gen: v7x
topology: tpu7x:2x2x1
jax: 0.10.0
libtpu: 0.0.40
codegen_flags: <defaults>
</compile_context>

<pallas_src>
import jax
import jax.numpy as jnp
from jax.experimental import pallas as pl
from jax.experimental.pallas import tpu as pltpu

_LANES = 128
_MIB = 1024 * 1024


def _sublane_multiple(dtype) -> int:
    # Minimum sublane tile per dtype: 8 for 4-byte, 16 for 2-byte, 32 for 1-byte.
    itemsize = jnp.dtype(dtype).itemsize
    return max(8, 32 // itemsize)


def _tpu_generation() -> str:
    """Best-effort chip-generation sniff; falls back to a conservative default."""
    try:
        kind = jax.devices()[0].device_kind.lower()
    except Exception:
        return "unknown"
    if "v7" in kind:
        return "v7x"
    if "v6" in kind:
        return "v6e"
    if "v5" in kind and ("lite" in kind or "5e" in kind):
        return "v5e"
    return "unknown"


# Byte-targeted block size per buffer; 2x(in) + 2x(out) double buffering keeps
# total VMEM at 4x this value, under every generation's scoped VMEM default.
_GEN_TARGET_BLOCK_BYTES = {
    "v7x": 4 * _MIB,
    "v6e": 2 * _MIB,
    "v5e": 1 * _MIB,
    "unknown": 1 * _MIB,
}
# Only v7x has 2 TensorCores per chip; only there is splitting small grids useful.
_GEN_MULTI_TC = {"v7x": True, "v6e": False, "v5e": False, "unknown": False}
_MIN_BLOCK_BYTES_MULTI_TC = 256 * 1024  # don't shrink below ~256 KiB when splitting


def _make_swish_kernel(beta: float):
    def kernel(x_ref, o_ref):
        x = x_ref[...]
        b = jnp.asarray(beta, dtype=x.dtype)  # keep compute in x's dtype
        o_ref[...] = (x * jax.nn.sigmoid(b * x)).astype(o_ref.dtype)
    return kernel


def _choose_block_rows(rows: int, dtype, generation: str) -> int:
    itemsize = jnp.dtype(dtype).itemsize
    sub = _sublane_multiple(dtype)
    bytes_per_row = _LANES * itemsize
    target_rows = max(sub, _GEN_TARGET_BLOCK_BYTES[generation] // bytes_per_row)
    if _GEN_MULTI_TC[generation]:
        # v7x megacore: aim for >= 4 grid steps (>= 2 per TensorCore) so each
        # core can overlap DMA with compute, but keep blocks >= ~256 KiB.
        min_rows = max(sub, _MIN_BLOCK_BYTES_MULTI_TC // bytes_per_row)
        target_rows = min(target_rows, max(min_rows, pl.cdiv(rows, 4)))
    if rows <= target_rows:
        return rows  # one full-extent block (always a legal block shape)
    return max(sub, (target_rows // sub) * sub)


def _swish_pallas_2d(x2d: jax.Array, beta: float, generation: str) -> jax.Array:
    rows, lanes = x2d.shape
    assert lanes == _LANES
    br = _choose_block_rows(rows, x2d.dtype, generation)
    grid = (pl.cdiv(rows, br),)  # ragged last row-block handled by Pallas masking
    return pl.pallas_call(
        _make_swish_kernel(beta),
        out_shape=jax.ShapeDtypeStruct((rows, _LANES), x2d.dtype),
        grid_spec=pltpu.PrefetchScalarGridSpec(
            num_scalar_prefetch=0,
            grid=grid,
            in_specs=[pl.BlockSpec((br, _LANES), lambda i: (i, 0))],
            out_specs=pl.BlockSpec((br, _LANES), lambda i: (i, 0)),
        ),
        compiler_params=pltpu.CompilerParams(
            dimension_semantics=("parallel",),
        ),
    )(x2d)


def swish(x: jax.Array, beta: float = 1.0) -> jax.Array:
    """Elementwise Swish on TPU via Pallas. Matches torch: x * sigmoid(beta * x).

    `beta` is a static Python float (trainable_beta=False in the reference module).
    # TODO(synk): for a trainable (traced) beta, pass it as a scalar-prefetch
    # SMEM operand (num_scalar_prefetch=1) instead of closing over it.
    """
    orig_shape = x.shape
    generation = _tpu_generation()

    flat = x.reshape(-1)  # layout-preserving, free
    n = flat.shape[0]
    rem = n % _LANES
    n_main = n - rem

    if rem == 0:
        # Common case (conv-style NCHW activations): zero pad/slice HBM passes.
        out_flat = _swish_pallas_2d(
            flat.reshape(-1, _LANES), beta, generation
        ).reshape(-1)
    elif n_main == 0:
        # Tiny tensor (< 128 elements): not worth a kernel launch.
        out_flat = flat * jax.nn.sigmoid(jnp.asarray(beta, flat.dtype) * flat)
    else:
        # Lane-aligned prefix through Pallas, <128-element tail with plain jnp
        # (avoids the full-tensor pad + slice passes of the previous version).
        main = _swish_pallas_2d(
            flat[:n_main].reshape(-1, _LANES), beta, generation
        ).reshape(-1)
        tail = flat[n_main:]
        tail = tail * jax.nn.sigmoid(jnp.asarray(beta, tail.dtype) * tail)
        out_flat = jnp.concatenate([main, tail])

    return out_flat.reshape(orig_shape)


def swish_reference(x: jax.Array, beta: float = 1.0) -> jax.Array:
    return x * jax.nn.sigmoid(beta * x)


if __name__ == "__main__":
    key = jax.random.PRNGKey(0)
    initial_beta = 1.0  # module constructed with trainable_beta=False, initial_beta=1.0

    # Small NCHW-style input, matching the conv-style tensors this module sees.
    x = jax.random.normal(key, (2, 4, 16, 16), dtype=jnp.float32)
    y = jax.block_until_ready(swish(x, beta=initial_beta))
    y_ref = swish_reference(x, beta=initial_beta)
    assert y.shape == x.shape and y.dtype == x.dtype
    assert jnp.allclose(y, y_ref, atol=1e-6, rtol=1e-6), "mismatch vs reference"

    # Non-lane-aligned shape exercises the ragged-tail path (no pad/slice pass).
    x2 = jax.random.normal(jax.random.PRNGKey(1), (2, 4, 15, 15), dtype=jnp.float32)
    y2 = jax.block_until_ready(swish(x2, beta=initial_beta))
    y2_ref = swish_reference(x2, beta=initial_beta)
    assert y2.shape == x2.shape and y2.dtype == x2.dtype
    assert jnp.allclose(y2, y2_ref, atol=1e-6, rtol=1e-6), "mismatch vs reference (tail)"

    print("KERNEL_OK")
</pallas_src>

<mosaic_0001>
module attributes {stable_mosaic.version = 11 : i64} {
  func.func @kernel(%arg0: i32, %arg1: memref<16x128xf32, #tpu.memory_space<vmem>>, %arg2: memref<16x128xf32, #tpu.memory_space<vmem>>) attributes {dimension_semantics = [#tpu.dimension_semantics<parallel>], iteration_bounds = array<i64: 1>, scalar_prefetch = 0 : i64, scratch_operands = 0 : i64, tpu.core_type = #tpu.core_type<tc>, window_params = [{transform_indices = @transform_0, window_bounds = array<i64: 16, 128>}, {transform_indices = @transform_1, window_bounds = array<i64: 16, 128>}]} {
    %c0 = arith.constant 0 : index
    %c0_0 = arith.constant 0 : index
    %0 = vector.load %arg1[%c0, %c0_0] : memref<16x128xf32, #tpu.memory_space<vmem>>, vector<16x128xf32>
    %cst = arith.constant 1.000000e+00 : f32
    %1 = vector.broadcast %cst : f32 to vector<16x128xf32>
    %2 = arith.mulf %1, %0 : vector<16x128xf32>
    %3 = arith.negf %2 : vector<16x128xf32>
    %4 = math.exp %3 : vector<16x128xf32>
    %cst_1 = arith.constant 1.000000e+00 : f32
    %5 = vector.broadcast %cst_1 : f32 to vector<16x128xf32>
    %6 = arith.addf %5, %4 : vector<16x128xf32>
    %7 = arith.divf %5, %6 : vector<16x128xf32>
    %8 = arith.mulf %0, %7 : vector<16x128xf32>
    %c0_2 = arith.constant 0 : index
    %c0_3 = arith.constant 0 : index
    %9 = vector.load %arg2[%c0_2, %c0_3] : memref<16x128xf32, #tpu.memory_space<vmem>>, vector<16x128xf32>
    tpu.vector_store %arg2[%c0_2, %c0_3], %8 {strides = array<i32>} : memref<16x128xf32, #tpu.memory_space<vmem>>, vector<16x128xf32>,
    return
  }
  func.func @transform_0(%arg0: i32) -> (i32, i32) {
    %c0_i32 = arith.constant 0 : i32
    %c0_i32_0 = arith.constant 0 : i32
    return %arg0, %c0_i32 : i32, i32
  }
  func.func @transform_1(%arg0: i32) -> (i32, i32) {
    %c0_i32 = arith.constant 0 : i32
    %c0_i32_0 = arith.constant 0 : i32
    return %arg0, %c0_i32 : i32, i32
  }
}

</mosaic_0001>

<llo_original>
// kernel: tpu_custom_call.1
$region0: #{tpu_custom_call.1}
  #allocation0 [shape = 'u32[]', space=smem, size = 0x4, offset = 0x4, fixed_abs, tag = 'smem constant byte address 0x4 - core index']
  #allocation1 [shape = 'u32[144,128]{1,0:T(1,128)}', space=vmem, size = 0x12000, scoped, tag = 'internal scratch']
  %s0 = inlined_call_operand.hbm [shape: f32[16,128], index: 0, kind: input, shape index: {}]
  %s1 = inlined_call_operand.hbm [shape: f32[16,128], index: 1, kind: output, shape index: {}]
  %s2 = sld [smem:[#allocation0]]
  $region18: #{tpu_custom_call.1} parent=0
    _
  %s4 = ssub.s32 1, %s2
  %s5 = scalar_select 0, %s4, %s2
  $region1: #{tpu_custom_call.1} parent=0
    #allocation2 [shape = 'u8[8192]{0}', space=vmem, size = 0x2000, scoped, tag = 'input window, operand 0, single buffered']
    #allocation3 [shape = 's32[1]{0}', space=sflag, size = 0x4, scoped, tag = 'scoped memory for tpu_custom_call.1']
    #allocation4 [shape = 's32[1]{0}', space=sflag, size = 0x4, scoped, tag = 'scoped memory for tpu_custom_call.1']
    #allocation5 [shape = 'u8[8192]{0}', space=vmem, size = 0x2000, scoped, tag = 'output window, operand 0, single buffered']
    %6 = vsyncpa [#allocation3], 0
    %7 = vsyncpa [#allocation4], 0
    // Predicated region
    $region2: #{tpu_custom_call.1} parent=1 // pred_check
      _
    $region3: #{tpu_custom_call.1} parent=1 // pred_check_branch
      %9 = sbr.rel (0) target = $region5
    $region4: #{tpu_custom_call.1} parent=1 // pred_region
      %s11 = ssub.s32 256, 256
      %12 = vsyncadd [#allocation3], %s11
      %s13 = sshll.u32 [#allocation2], 4
      %s14 = int_to_ptr.vmem [resolvable:$true] %s13
      %19 = dma.hbm_to_vmem [thread:$0]  %s0, 256, %s14, [#allocation3], 128, 128, 8
    $region5: #{tpu_custom_call.1} parent=1 // pred_fallthru
      _
    // Predicated region
    $region6: #{tpu_custom_call.1} parent=1 // pred_check
      _
    $region7: #{tpu_custom_call.1} parent=1 // pred_check_branch
      %21 = sbr.rel (0) target = $region9
    $region8: #{tpu_custom_call.1} parent=1 // pred_region
      %22 = dma.done [#allocation3], 256
    $region9: #{tpu_custom_call.1} parent=1 // pred_fallthru
      _
    %v23 = vld [vmem:[#allocation2] sm:$0xff]
    %v24 = vld [vmem:[#allocation2 + $0x8] sm:$0xff]
    %v25 = vxor.u32 %v23, 2147483648
    %v26 = vxor.u32 %v24, 2147483648
    %v27 = vmul.f32 %v25, 1.442695
    %v28 = vpow.pop %v27
    %v29 = vmul.f32 %v26, 1.442695
    %v30 = vpow.pop %v29
    %v31 = vadd.f32 %v28, 1.0
    %v32 = vadd.f32 %v30, 1.0
    %v33 = vrcp.pop %v31
    %v34 = vmul.f32 1.0, %v33
    %v35 = vrcp.pop %v32
    %v36 = vmul.f32 1.0, %v35
    %v37 = vmul.f32 %v23, %v34
    %v38 = vmul.f32 %v24, %v36
    %39 = vst [vmem:[#allocation5] sm:$0xff] %v37
    %40 = vst [vmem:[#allocation5 + $0x8] sm:$0xff] %v38
    // Predicated region
    $region10: #{tpu_custom_call.1} parent=1 // pred_check
      _
    $region11: #{tpu_custom_call.1} parent=1 // pred_check_branch
      %42 = sbr.rel (0) target = $region13
    $region12: #{tpu_custom_call.1} parent=1 // pred_region
      %s44 = ssub.s32 256, 256
      %45 = vsyncadd [#allocation4], %s44
      %s46 = sshll.u32 [#allocation5], 4
      %s47 = int_to_ptr.vmem [resolvable:$true] %s46
      %52 = dma.vmem_to_hbm [thread:$0]  %s47, 256, %s1, [#allocation4], 128, 128, 8
    $region13: #{tpu_custom_call.1} parent=1 // pred_fallthru
      _
    // Predicated region
    $region14: #{tpu_custom_call.1} parent=1 // pred_check
      _
    $region15: #{tpu_custom_call.1} parent=1 // pred_check_branch
      %54 = sbr.rel (0) target = $region17
    $region16: #{tpu_custom_call.1} parent=1 // pred_region
      %55 = dma.done [#allocation4], 256
    $region17: #{tpu_custom_call.1} parent=1 // pred_fallthru
      _
    %56 = vsyncpa [#allocation3], 1
    %57 = vsyncpa [#allocation4], 1

</llo_original>
